<compile_context>
chip_gen: v7x
topology: tpu7x:2x2x1
jax: 0.10.0
libtpu: 0.0.40
codegen_flags: <defaults>
</compile_context>

<pallas_src>
import functools

import jax
import jax.numpy as jnp
import numpy as np
from jax.experimental import pallas as pl
from jax.experimental.pallas import tpu as pltpu


# --------------------------------------------------------------------------- #
# In-kernel helpers
# --------------------------------------------------------------------------- #
def _fma(means, stds, noise, out_dtype):
    """out = means + noise * stds, math in f32, stored in the input dtype."""
    return (means.astype(jnp.float32)
            + noise * stds.astype(jnp.float32)).astype(out_dtype)


def _standard_normal(shape):
    """N(0,1) f32 sample from the TPU hardware PRNG (prng_seed must be called)."""
    if hasattr(pltpu, "stateful_normal"):
        return pltpu.stateful_normal(shape, jnp.float32)

    # TODO(synk): Box-Muller fallback for jax versions without stateful_normal.
    # Pairs (r*cos, r*sin) along the sublane axis -> ~1.5 transcendentals/elem.
    rows, cols = shape
    assert rows % 2 == 0, "row block must be a multiple of 2"
    half_rows = rows // 2

    def u01(s):
        bits = pltpu.bitcast(pltpu.prng_random_bits(s), jnp.uint32)
        mant = (bits >> jnp.uint32(9)) | jnp.uint32(0x3F800000)
        return pltpu.bitcast(mant, jnp.float32) - 1.0  # uniform in [0, 1)

    u1 = jnp.maximum(u01((half_rows, cols)), 1e-7)  # avoid log(0)
    u2 = u01((half_rows, cols))
    r = jnp.sqrt(-2.0 * jnp.log(u1))
    t = (2.0 * np.pi) * u2
    return jnp.concatenate([r * jnp.cos(t), r * jnp.sin(t)], axis=0)


# --------------------------------------------------------------------------- #
# Kernel bodies
# --------------------------------------------------------------------------- #
def _kernel_split_hwprng(seed_ref, m_ref, s_ref, o_ref):
    """means/stds come in as two lane-aligned half-width blocks; noise in-kernel."""
    # Multi-argument prng_seed hashes the seeds together -> per-block streams
    # without consecutive-integer-seed correlation.
    pltpu.prng_seed(seed_ref[0], pl.program_id(0))
    noise = _standard_normal(o_ref.shape)
    o_ref[...] = _fma(m_ref[...], s_ref[...], noise, o_ref.dtype)


def _kernel_whole_hwprng(seed_ref, x_ref, o_ref, *, half):
    """Fallback for half % 128 != 0: load the full-width block and slice."""
    pltpu.prng_seed(seed_ref[0], pl.program_id(0))
    x = x_ref[...]
    noise = _standard_normal(o_ref.shape)
    o_ref[...] = _fma(x[:, :half], x[:, half:], noise, o_ref.dtype)


def _kernel_split_extnoise(m_ref, s_ref, n_ref, o_ref):
    """Non-TPU backends: noise precomputed outside (no HW PRNG available)."""
    o_ref[...] = _fma(m_ref[...], s_ref[...], n_ref[...].astype(jnp.float32),
                      o_ref.dtype)


def _kernel_whole_extnoise(x_ref, n_ref, o_ref, *, half):
    x = x_ref[...]
    o_ref[...] = _fma(x[:, :half], x[:, half:], n_ref[...].astype(jnp.float32),
                      o_ref.dtype)


# --------------------------------------------------------------------------- #
# Wrapper
# --------------------------------------------------------------------------- #
def gaussian_network(x, seed, *, row_block=512):
    """means + noise * stds over the last dim of x, noise ~ N(0,1)."""
    lead = tuple(int(d) for d in x.shape[:-1])
    D = int(x.shape[-1])
    assert D % 2 == 0, "last dim must be even"
    half = D // 2

    M = 1
    for d in lead:
        M *= d
    M = max(M, 1)
    x2 = x.reshape(M, D)  # row-major reshape: free, no HBM pass

    # Sublane granularity by itemsize (8 for f32, 16 for bf16, 32 for int8).
    itemsize = np.dtype(x.dtype).itemsize
    sub = 8 if itemsize >= 4 else (16 if itemsize == 2 else 32)

    # Biggest row block that is (a) a multiple of the sublane tile and
    # (b) no larger than the (rounded-up) problem; sweepable via row_block.
    rb = min(int(row_block), pl.cdiv(M, sub) * sub)
    rb = max(sub, (rb // sub) * sub)
    grid = (pl.cdiv(M, rb),)

    aligned = (half % 128 == 0)
    out_shape = jax.ShapeDtypeStruct((M, half), x.dtype)
    out_block = pl.BlockSpec((rb, half), lambda i, *_: (i, 0))

    cost = pl.CostEstimate(
        flops=2 * M * half,
        transcendentals=2 * M * half,        # upper bound (Box-Muller path)
        bytes_accessed=(M * D + M * half) * itemsize,
    )
    cparams = pltpu.CompilerParams(dimension_semantics=("parallel",))

    if jax.default_backend() == "tpu":
        # Fully fused path: the N(0,1) draw happens in VMEM, never hits HBM.
        seed_arr = jnp.asarray(seed, dtype=jnp.int32).reshape((1,))
        if aligned:
            kern = _kernel_split_hwprng
            in_specs = [pl.BlockSpec((rb, half), lambda i, s: (i, 0)),
                        pl.BlockSpec((rb, half), lambda i, s: (i, 1))]
            operands = (seed_arr, x2, x2)
        else:
            kern = functools.partial(_kernel_whole_hwprng, half=half)
            in_specs = [pl.BlockSpec((rb, D), lambda i, s: (i, 0))]
            operands = (seed_arr, x2)
        out = pl.pallas_call(
            kern,
            out_shape=out_shape,
            grid_spec=pltpu.PrefetchScalarGridSpec(
                num_scalar_prefetch=1,
                grid=grid,
                in_specs=in_specs,
                out_specs=out_block),
            compiler_params=cparams,
            cost_estimate=cost,
        )(*operands)
    else:
        # Non-TPU backends (CPU / interpret): the TPU PRNG primitives don't
        # lower there, so draw the noise with jax.random and fuse only the
        # split + FMA inside the kernel.
        noise = jax.random.normal(jax.random.PRNGKey(seed), (M, half),
                                  jnp.float32)
        if aligned:
            kern = _kernel_split_extnoise
            in_specs = [pl.BlockSpec((rb, half), lambda i: (i, 0)),
                        pl.BlockSpec((rb, half), lambda i: (i, 1)),
                        pl.BlockSpec((rb, half), lambda i: (i, 0))]
            operands = (x2, x2, noise)
        else:
            kern = functools.partial(_kernel_whole_extnoise, half=half)
            in_specs = [pl.BlockSpec((rb, D), lambda i: (i, 0)),
                        pl.BlockSpec((rb, half), lambda i: (i, 0))]
            operands = (x2, noise)
        out = pl.pallas_call(
            kern,
            out_shape=out_shape,
            grid=grid,
            in_specs=in_specs,
            out_specs=pl.BlockSpec((rb, half), lambda i: (i, 0)),
            compiler_params=cparams,
            cost_estimate=cost,
        )(*operands)

    return out.reshape(lead + (half,))


# --------------------------------------------------------------------------- #
# Demo / sanity check
# --------------------------------------------------------------------------- #
if __name__ == "__main__":
    key = jax.random.PRNGKey(0)
    # batch=2, seq=8, feature=256  ->  output width 128 (lane-dense)
    B, S, D = 2, 8, 256
    x = jax.random.normal(key, (B, S, D), jnp.float32)
    seed = 1234

    fwd = jax.jit(gaussian_network)
    out = jax.block_until_ready(fwd(x, seed))

    out_np = np.asarray(out)
    means = np.asarray(x[..., : D // 2])
    stds = np.asarray(x[..., D // 2:])
    assert out_np.shape == (B, S, D // 2), out_np.shape
    assert out_np.dtype == x.dtype
    assert np.all(np.isfinite(out_np))
    # Recovered noise (out - means) / stds should look standard normal where the
    # std is not tiny (~1900 samples -> loose tolerances are extremely safe).
    mask = np.abs(stds) > 0.1
    z = (out_np - means)[mask] / stds[mask]
    assert abs(float(z.mean())) < 0.25, float(z.mean())
    assert 0.6 < float(z.std()) < 1.4, float(z.std())

    print("KERNEL_OK")
</pallas_src>

<mosaic_0001>
module attributes {stable_mosaic.version = 11 : i64} {
  func.func @_kernel_split_extnoise(%arg0: i32, %arg1: memref<16x128xf32, #tpu.memory_space<vmem>>, %arg2: memref<16x128xf32, #tpu.memory_space<vmem>>, %arg3: memref<16x128xf32, #tpu.memory_space<vmem>>, %arg4: memref<16x128xf32, #tpu.memory_space<vmem>>) attributes {dimension_semantics = [#tpu.dimension_semantics<parallel>], iteration_bounds = array<i64: 1>, scalar_prefetch = 0 : i64, scratch_operands = 0 : i64, tpu.core_type = #tpu.core_type<tc>, window_params = [{transform_indices = @transform_0, window_bounds = array<i64: 16, 128>}, {transform_indices = @transform_1, window_bounds = array<i64: 16, 128>}, {transform_indices = @transform_2, window_bounds = array<i64: 16, 128>}, {transform_indices = @transform_3, window_bounds = array<i64: 16, 128>}]} {
    %c0 = arith.constant 0 : index
    %c0_0 = arith.constant 0 : index
    %0 = vector.load %arg1[%c0, %c0_0] : memref<16x128xf32, #tpu.memory_space<vmem>>, vector<16x128xf32>
    %c0_1 = arith.constant 0 : index
    %c0_2 = arith.constant 0 : index
    %1 = vector.load %arg2[%c0_1, %c0_2] : memref<16x128xf32, #tpu.memory_space<vmem>>, vector<16x128xf32>
    %c0_3 = arith.constant 0 : index
    %c0_4 = arith.constant 0 : index
    %2 = vector.load %arg3[%c0_3, %c0_4] : memref<16x128xf32, #tpu.memory_space<vmem>>, vector<16x128xf32>
    %3 = arith.mulf %2, %1 : vector<16x128xf32>
    %4 = arith.addf %0, %3 : vector<16x128xf32>
    %c0_5 = arith.constant 0 : index
    %c0_6 = arith.constant 0 : index
    %5 = vector.load %arg4[%c0_5, %c0_6] : memref<16x128xf32, #tpu.memory_space<vmem>>, vector<16x128xf32>
    tpu.vector_store %arg4[%c0_5, %c0_6], %4 {strides = array<i32>} : memref<16x128xf32, #tpu.memory_space<vmem>>, vector<16x128xf32>,
    return
  }
  func.func @transform_0(%arg0: i32) -> (i32, i32) {
    %c0_i32 = arith.constant 0 : i32
    %c0_i32_0 = arith.constant 0 : i32
    return %arg0, %c0_i32 : i32, i32
  }
  func.func @transform_1(%arg0: i32) -> (i32, i32) {
    %c1_i32 = arith.constant 1 : i32
    %c0_i32 = arith.constant 0 : i32
    return %arg0, %c1_i32 : i32, i32
  }
  func.func @transform_2(%arg0: i32) -> (i32, i32) {
    %c0_i32 = arith.constant 0 : i32
    %c0_i32_0 = arith.constant 0 : i32
    return %arg0, %c0_i32 : i32, i32
  }
  func.func @transform_3(%arg0: i32) -> (i32, i32) {
    %c0_i32 = arith.constant 0 : i32
    %c0_i32_0 = arith.constant 0 : i32
    return %arg0, %c0_i32 : i32, i32
  }
}

</mosaic_0001>

<llo_original>
// kernel: gaussian_network.1
$region0: #{gaussian_network.1}
  #allocation0 [shape = 'u32[]', space=smem, size = 0x4, offset = 0x4, fixed_abs, tag = 'smem constant byte address 0x4 - core index']
  #allocation1 [shape = 'u32[144,128]{1,0:T(1,128)}', space=vmem, size = 0x12000, scoped, tag = 'internal scratch']
  %s0 = inlined_call_operand.vmem [shape: f32[16,256], index: 0, kind: input, shape index: {}, may-alias: {0,1}]
  %s1 = inlined_call_operand.vmem [shape: f32[16,256], index: 1, kind: input, shape index: {}, may-alias: {0,1}]
  %s2 = inlined_call_operand.vmem [shape: f32[16,128], index: 2, kind: input, shape index: {}]
  %s3 = inlined_call_operand.hbm [shape: f32[16,128], index: 3, kind: output, shape index: {}]
  %s4 = sld [smem:[#allocation0]]
  $region98: #{gaussian_network.1} parent=0
    _
  %s6 = ssub.s32 1, %s4
  %s7 = scalar_select 0, %s6, %s4
  $region1: #{gaussian_network.1} parent=0
    #allocation2 [shape = 'u8[8192]{0}', space=vmem, size = 0x2000, scoped, tag = 'input window, operand 0, single buffered']
    #allocation3 [shape = 'u8[8192]{0}', space=vmem, size = 0x2000, scoped, tag = 'input window, operand 1, single buffered']
    #allocation4 [shape = 'u8[8192]{0}', space=vmem, size = 0x2000, scoped, tag = 'output window, operand 0, single buffered']
    #allocation5 [shape = 's32[1]{0}', space=sflag, size = 0x4, scoped, tag = 'scoped memory for gaussian_network.1']
    %8 = vsyncpa [#allocation5], 0
    // Predicated region
    $region2: #{gaussian_network.1} parent=1 // pred_check
      _
    $region3: #{gaussian_network.1} parent=1 // pred_check_branch
      %10 = sbr.rel (0) target = $region5
    $region4: #{gaussian_network.1} parent=1 // pred_region
      // Predicated region
      $region6: #{gaussian_network.1} parent=4 // pred_check
        _
      $region7: #{gaussian_network.1} parent=4 // pred_check_branch
        %12 = sbr.rel (0) target = $region9
      $region8: #{gaussian_network.1} parent=4 // pred_region
        // Predicated region
        $region10: #{gaussian_network.1} parent=8 // pred_check
          _
        $region11: #{gaussian_network.1} parent=8 // pred_check_branch
          %14 = sbr.rel (0) target = $region13
        $region12: #{gaussian_network.1} parent=8 // pred_region
          // Predicated region
          $region25: #{gaussian_network.1} parent=12 // pred_check
            _
          $region26: #{gaussian_network.1} parent=12 // pred_check_branch
            %31 = sbr.rel (0) target = $region28
          $region27: #{gaussian_network.1} parent=12 // pred_region
            loop: start=0, step=1, limit=1
            $region29: #{gaussian_network.1} parent=27 // loop_pre_header
              _
            $region30: #{gaussian_network.1} parent=27 // loop_header
              %s33 = sphi 0, %s37
              %p34 = scmp.ge.s32.totalorder %s33, 1
              %s38 = sphi %s0, %s0
              %s39 = sphi [#allocation2], [#allocation2]
            $region31: #{gaussian_network.1} parent=27 // loop_header_branch
              %36 = sbr.rel (%p34) target = $region35
            $region32: #{gaussian_network.1} parent=27 // loop_body
              %v40 = vld [vmem:[%s38] sm:$0xff]
              %41 = vst [vmem:[%s39] sm:$0xff] %v40
              %v42 = vld [vmem:[%s38 + $0x10] sm:$0xff]
              %43 = vst [vmem:[%s39 + $0x8] sm:$0xff] %v42
            $region33: #{gaussian_network.1} parent=27 // loop_footer
              %s37 = sadd.s32 1, %s33
            $region34: #{gaussian_network.1} parent=27 // loop_footer_branch
              %32 = sbr.rel target = $region30
            $region35: #{gaussian_network.1} parent=27 // loop_exit
              _
          $region28: #{gaussian_network.1} parent=12 // pred_fallthru
            _
          // Predicated region
          $region36: #{gaussian_network.1} parent=12 // pred_check
            _
          $region37: #{gaussian_network.1} parent=12 // pred_check_branch
            %45 = sbr.rel target = $region39
          $region38: #{gaussian_network.1} parent=12 // pred_region
            _
          $region39: #{gaussian_network.1} parent=12 // pred_fallthru
            _
        $region13: #{gaussian_network.1} parent=8 // pred_fallthru
          _
        // Predicated region
        $region14: #{gaussian_network.1} parent=8 // pred_check
          _
        $region15: #{gaussian_network.1} parent=8 // pred_check_branch
          %16 = sbr.rel target = $region17
        $region16: #{gaussian_network.1} parent=8 // pred_region
          loop: start=0, step=1, limit=1
          $region18: #{gaussian_network.1} parent=16 // loop_pre_header
            _
          $region19: #{gaussian_network.1} parent=16 // loop_header
            %s19 = sphi 0, %s23
            %p20 = scmp.ge.s32.totalorder %s19, 1
            %s24 = sphi %s0, %s0
            %s25 = sphi [#allocation2], [#allocation2]
          $region20: #{gaussian_network.1} parent=16 // loop_header_branch
            %22 = sbr.rel (%p20) target = $region24
          $region21: #{gaussian_network.1} parent=16 // loop_body
            %v26 = vld [vmem:[%s24] sm:$0xff]
            %27 = vst [vmem:[%s25] sm:$0xff] %v26
            %v28 = vld [vmem:[%s24 + $0x10] sm:$0xff]
            %29 = vst [vmem:[%s25 + $0x8] sm:$0xff] %v28
          $region22: #{gaussian_network.1} parent=16 // loop_footer
            %s23 = sadd.s32 1, %s19
          $region23: #{gaussian_network.1} parent=16 // loop_footer_branch
            %18 = sbr.rel target = $region19
          $region24: #{gaussian_network.1} parent=16 // loop_exit
            _
        $region17: #{gaussian_network.1} parent=8 // pred_fallthru
          _
      $region9: #{gaussian_network.1} parent=4 // pred_fallthru
        _
      %46 = vnop
    $region5: #{gaussian_network.1} parent=1 // pred_fallthru
      _
    // Predicated region
    $region40: #{gaussian_network.1} parent=1 // pred_check
      _
    $region41: #{gaussian_network.1} parent=1 // pred_check_branch
      %48 = sbr.rel (0) target = $region43
    $region42: #{gaussian_network.1} parent=1 // pred_region
      %s49 = scalar_lea.vmem %s1, 8
      // Predicated region
      $region44: #{gaussian_network.1} parent=42 // pred_check
        _
      $region45: #{gaussian_network.1} parent=42 // pred_check_branch
        %51 = sbr.rel (0) target = $region47
      $region46: #{gaussian_network.1} parent=42 // pred_region
        // Predicated region
        $region48: #{gaussian_network.1} parent=46 // pred_check
          _
        $region49: #{gaussian_network.1} parent=46 // pred_check_branch
          %53 = sbr.rel (0) target = $region51
        $region50: #{gaussian_network.1} parent=46 // pred_region
          // Predicated region
          $region63: #{gaussian_network.1} parent=50 // pred_check
            _
          $region64: #{gaussian_network.1} parent=50 // pred_check_branch
            %70 = sbr.rel (0) target = $region66
          $region65: #{gaussian_network.1} parent=50 // pred_region
            loop: start=0, step=1, limit=1
            $region67: #{gaussian_network.1} parent=65 // loop_pre_header
              _
            $region68: #{gaussian_network.1} parent=65 // loop_header
              %s72 = sphi 0, %s76
              %p73 = scmp.ge.s32.totalorder %s72, 1
              %s77 = sphi %s49, %s49
              %s78 = sphi [#allocation3], [#allocation3]
            $region69: #{gaussian_network.1} parent=65 // loop_header_branch
              %75 = sbr.rel (%p73) target = $region73
            $region70: #{gaussian_network.1} parent=65 // loop_body
              %v79 = vld [vmem:[%s77] sm:$0xff]
              %80 = vst [vmem:[%s78] sm:$0xff] %v79
              %v81 = vld [vmem:[%s77 + $0x10] sm:$0xff]
              %82 = vst [vmem:[%s78 + $0x8] sm:$0xff] %v81
            $region71: #{gaussian_network.1} parent=65 // loop_footer
              %s76 = sadd.s32 1, %s72
            $region72: #{gaussian_network.1} parent=65 // loop_footer_branch
              %71 = sbr.rel target = $region68
            $region73: #{gaussian_network.1} parent=65 // loop_exit
              _
          $region66: #{gaussian_network.1} parent=50 // pred_fallthru
            _
          // Predicated region
          $region74: #{gaussian_network.1} parent=50 // pred_check
            _
          $region75: #{gaussian_network.1} parent=50 // pred_check_branch
            %84 = sbr.rel target = $region77
          $region76: #{gaussian_network.1} parent=50 // pred_region
            _
          $region77: #{gaussian_network.1} parent=50 // pred_fallthru
            _
        $region51: #{gaussian_network.1} parent=46 // pred_fallthru
          _
        // Predicated region
        $region52: #{gaussian_network.1} parent=46 // pred_check
          _
        $region53: #{gaussian_network.1} parent=46 // pred_check_branch
          %55 = sbr.rel target = $region55
        $region54: #{gaussian_network.1} parent=46 // pred_region
          loop: start=0, step=1, limit=1
          $region56: #{gaussian_network.1} parent=54 // loop_pre_header
            _
          $region57: #{gaussian_network.1} parent=54 // loop_header
            %s58 = sphi 0, %s62
            %p59 = scmp.ge.s32.totalorder %s58, 1
            %s63 = sphi %s49, %s49
            %s64 = sphi [#allocation3], [#allocation3]
          $region58: #{gaussian_network.1} parent=54 // loop_header_branch
            %61 = sbr.rel (%p59) target = $region62
          $region59: #{gaussian_network.1} parent=54 // loop_body
            %v65 = vld [vmem:[%s63] sm:$0xff]
            %66 = vst [vmem:[%s64] sm:$0xff] %v65
            %v67 = vld [vmem:[%s63 + $0x10] sm:$0xff]
            %68 = vst [vmem:[%s64 + $0x8] sm:$0xff] %v67
          $region60: #{gaussian_network.1} parent=54 // loop_footer
            %s62 = sadd.s32 1, %s58
          $region61: #{gaussian_network.1} parent=54 // loop_footer_branch
            %57 = sbr.rel target = $region57
          $region62: #{gaussian_network.1} parent=54 // loop_exit
            _
        $region55: #{gaussian_network.1} parent=46 // pred_fallthru
          _
      $region47: #{gaussian_network.1} parent=42 // pred_fallthru
        _
      %85 = vnop
    $region43: #{gaussian_network.1} parent=1 // pred_fallthru
      _
    // Predicated region
    $region78: #{gaussian_network.1} parent=1 // pred_check
      _
    $region79: #{gaussian_network.1} parent=1 // pred_check_branch
      %87 = sbr.rel (0) target = $region81
    $region80: #{gaussian_network.1} parent=1 // pred_region
      _
    $region81: #{gaussian_network.1} parent=1 // pred_fallthru
      _
    // Predicated region
    $region82: #{gaussian_network.1} parent=1 // pred_check
      _
    $region83: #{gaussian_network.1} parent=1 // pred_check_branch
      %89 = sbr.rel (0) target = $region85
    $region84: #{gaussian_network.1} parent=1 // pred_region
      _
    $region85: #{gaussian_network.1} parent=1 // pred_fallthru
      _
    // Predicated region
    $region86: #{gaussian_network.1} parent=1 // pred_check
      _
    $region87: #{gaussian_network.1} parent=1 // pred_check_branch
      %91 = sbr.rel (0) target = $region89
    $region88: #{gaussian_network.1} parent=1 // pred_region
      _
    $region89: #{gaussian_network.1} parent=1 // pred_fallthru
      _
    %v92 = vld [vmem:[#allocation2] sm:$0xff]
    %v93 = vld [vmem:[#allocation2 + $0x8] sm:$0xff]
    %v94 = vld [vmem:[#allocation3] sm:$0xff]
    %v95 = vld [vmem:[#allocation3 + $0x8] sm:$0xff]
    %v96 = vld [vmem:[%s2] sm:$0xff]
    %v97 = vld [vmem:[%s2 + $0x8] sm:$0xff]
    %v98 = vmul.f32 %v96, %v94
    %v99 = vmul.f32 %v97, %v95
    %v100 = vadd.f32 %v92, %v98
    %v101 = vadd.f32 %v93, %v99
    %102 = vst [vmem:[#allocation4] sm:$0xff] %v100
    %103 = vst [vmem:[#allocation4 + $0x8] sm:$0xff] %v101
    // Predicated region
    $region90: #{gaussian_network.1} parent=1 // pred_check
      _
    $region91: #{gaussian_network.1} parent=1 // pred_check_branch
      %105 = sbr.rel (0) target = $region93
    $region92: #{gaussian_network.1} parent=1 // pred_region
      %s107 = ssub.s32 256, 256
      %108 = vsyncadd [#allocation5], %s107
      %s109 = sshll.u32 [#allocation4], 4
      %s110 = int_to_ptr.vmem [resolvable:$true] %s109
      %115 = dma.vmem_to_hbm [thread:$0]  %s110, 256, %s3, [#allocation5], 128, 128, 8
    $region93: #{gaussian_network.1} parent=1 // pred_fallthru
      _
    // Predicated region
    $region94: #{gaussian_network.1} parent=1 // pred_check
      _
    $region95: #{gaussian_network.1} parent=1 // pred_check_branch
      %117 = sbr.rel (0) target = $region97
    $region96: #{gaussian_network.1} parent=1 // pred_region
      %118 = dma.done [#allocation5], 256
    $region97: #{gaussian_network.1} parent=1 // pred_fallthru
      _
    %119 = vsyncpa [#allocation5], 1

</llo_original>
